<compile_context>
chip_gen: v7x
topology: tpu7x:2x2x1
jax: 0.10.0
libtpu: 0.0.40
codegen_flags: <defaults>
</compile_context>

<pallas_src>
import functools

import jax
import jax.numpy as jnp
from jax.experimental import pallas as pl
from jax.experimental.pallas import tpu as pltpu


def _channel_gate_kernel(x_ref, w1_ref, b1_ref, w2_ref, b2_ref, o_ref,
                         *, gate_activation, nb):
    # x_ref : (nb, C, HW)  nb batch items; channels in sublanes, spatial in lanes
    # w1_ref: (Cr, C)      fc1 weight, b1_ref: (Cr, 1) fc1 bias
    # w2_ref: (C, Cr)      fc2 weight, b2_ref: (C, 1)  fc2 bias
    # o_ref : (nb, C, HW)
    inv_hw = 1.0 / x_ref.shape[-1]
    w1 = w1_ref[...]
    b1 = b1_ref[...]
    w2 = w2_ref[...]
    b2 = b2_ref[...]

    # Static (unrolled) loop over the batch items in this block.  The per-item gate
    # math is tiny (O(C*Cr) flops, off the critical path); the dominant work is the
    # lane-dense (C, HW) rescale + store, which stays in the input dtype.
    for n in range(nb):
        xn = x_ref[n]                                              # (C, HW), input dtype

        # Global average pool over the spatial (lane) axis, accumulated in f32.
        mean = jnp.sum(xn, axis=-1, keepdims=True,
                       dtype=jnp.float32) * inv_hw                 # (C, 1)

        # fc1 (1x1 conv == matvec over channels) + bias + ReLU -> (Cr, 1)
        h = jnp.dot(w1, mean, preferred_element_type=jnp.float32)
        h = jnp.maximum(h + b1, 0.0)

        # fc2 + bias -> (C, 1), then gate activation.
        z = jnp.dot(w2, h, preferred_element_type=jnp.float32) + b2
        if gate_activation == "sigmoid":
            g = 1.0 / (1.0 + jnp.exp(-z))
        elif gate_activation == "relu":
            g = jnp.maximum(z, 0.0)
        elif gate_activation == "linear":
            g = z
        else:
            raise ValueError(f"Unknown gate activation: {gate_activation}")

        # Rescale in the input dtype: (C, 1) gate broadcasts across the lane/spatial dim.
        o_ref[n] = xn * g.astype(o_ref.dtype)


def _pick_batch_block(n_batch, per_item_bytes, target_bytes=2 << 20):
    """Pick how many batch items go into one grid block (~target_bytes per block)."""
    nb = max(1, min(n_batch, target_bytes // max(per_item_bytes, 1)))
    steps = pl.cdiv(n_batch, nb)
    if n_batch > 1 and steps < 2:
        # Keep >=2 grid steps so the pipeline has something to overlap and v7x's
        # two TensorCores both get work.
        nb = pl.cdiv(n_batch, 2)
        steps = pl.cdiv(n_batch, nb)
    if steps > 1 and steps % 2 == 1:
        # Prefer an even step count (v7x megacore balance) at the cost of a
        # slightly smaller block.
        nb = pl.cdiv(n_batch, steps + 1)
    return int(nb)


@functools.partial(jax.jit, static_argnames=("gate_activation", "donate_x"))
def channel_gate(x_nchw, fc1_w, fc1_b, fc2_w, fc2_b,
                 gate_activation="sigmoid", donate_x=False):
    """ChannelGate forward (default config).

    x_nchw: (N, C, H, W)
    fc1_w : (Cr, C, 1, 1), fc1_b: (Cr,)   where Cr = C // reduction
    fc2_w : (C, Cr, 1, 1), fc2_b: (C,)
    Returns: (N, C, H, W), same layout/dtype as the input (x * gates).
    """
    N, C, H, W = x_nchw.shape
    Cr = fc1_w.shape[0]
    HW = H * W
    itemsize = jnp.dtype(x_nchw.dtype).itemsize

    # Free reshape (spatial is already contiguous in NCHW) — no HBM transpose.
    # NOTE: if H*W is not a multiple of 128, output stores become lane-masked
    # (correct but slower); pad spatially upstream if profiling shows it matters.
    x_flat = x_nchw.reshape(N, C, HW)

    # Conv 1x1 weights -> plain matrices; biases as column vectors (sublane dim).
    w1_mat = fc1_w[:, :, 0, 0].astype(jnp.float32)     # (Cr, C)
    w2_mat = fc2_w[:, :, 0, 0].astype(jnp.float32)     # (C, Cr)
    b1_col = fc1_b.astype(jnp.float32).reshape(Cr, 1)
    b2_col = fc2_b.astype(jnp.float32).reshape(C, 1)

    per_item_bytes = C * HW * itemsize
    nb = _pick_batch_block(N, per_item_bytes)
    steps = pl.cdiv(N, nb)

    # VMEM budget: double-buffered input + output blocks plus resident weights.
    block_bytes = nb * per_item_bytes
    weight_bytes = 4 * (w1_mat.size + w2_mat.size + b1_col.size + b2_col.size)
    vmem_need = 4 * block_bytes + 2 * weight_bytes + (1 << 20)
    vmem_limit = int(min(max(vmem_need, 32 << 20), 48 << 20))

    kernel = functools.partial(_channel_gate_kernel,
                               gate_activation=gate_activation, nb=nb)

    cost = pl.CostEstimate(
        flops=int(N * (2 * C * HW + 4 * C * Cr)),          # pool + scale + 2 matvecs
        transcendentals=int(N * C) if gate_activation == "sigmoid" else 0,
        bytes_accessed=int(itemsize * 2 * N * C * HW       # x read once, y written once
                           + 4 * (2 * C * Cr + C + Cr)),   # f32 weights/biases
    )

    out_flat = pl.pallas_call(
        kernel,
        out_shape=jax.ShapeDtypeStruct((N, C, HW), x_nchw.dtype),
        grid_spec=pltpu.PrefetchScalarGridSpec(
            num_scalar_prefetch=0,
            grid=(steps,),
            in_specs=[
                pl.BlockSpec((nb, C, HW), lambda i: (i, 0, 0)),   # batch block
                pl.BlockSpec((Cr, C), lambda i: (0, 0)),          # resident weights
                pl.BlockSpec((Cr, 1), lambda i: (0, 0)),
                pl.BlockSpec((C, Cr), lambda i: (0, 0)),
                pl.BlockSpec((C, 1), lambda i: (0, 0)),
            ],
            out_specs=pl.BlockSpec((nb, C, HW), lambda i: (i, 0, 0)),
        ),
        compiler_params=pltpu.CompilerParams(
            dimension_semantics=("parallel",),
            vmem_limit_bytes=vmem_limit),
        cost_estimate=cost,
        input_output_aliases=({0: 0} if donate_x else {}),
    )(x_flat, w1_mat, b1_col, w2_mat, b2_col)

    return out_flat.reshape(N, C, H, W)


def _reference(x, fc1_w, fc1_b, fc2_w, fc2_b, gate_activation="sigmoid"):
    # Pure-JAX mirror of the PyTorch ChannelGate.forward (default config).
    pooled = jnp.mean(x, axis=(2, 3), keepdims=True)                     # (N,C,1,1)
    h = jnp.einsum("nchw,oc->nohw", pooled, fc1_w[:, :, 0, 0])
    h = h + fc1_b[None, :, None, None]
    h = jnp.maximum(h, 0.0)
    z = jnp.einsum("nchw,oc->nohw", h, fc2_w[:, :, 0, 0])
    z = z + fc2_b[None, :, None, None]
    if gate_activation == "sigmoid":
        g = jax.nn.sigmoid(z)
    elif gate_activation == "relu":
        g = jnp.maximum(z, 0.0)
    else:
        g = z
    return x * g


if __name__ == "__main__":
    key = jax.random.PRNGKey(0)
    k_x, k_w1, k_b1, k_w2, k_b2 = jax.random.split(key, 5)

    # Small shapes consistent with the module defaults (reduction=16).
    N, C, H, W = 2, 64, 16, 16
    reduction = 16
    Cr = C // reduction                      # 4

    x = jax.random.normal(k_x, (N, C, H, W), dtype=jnp.float32)
    fc1_w = jax.random.normal(k_w1, (Cr, C, 1, 1), dtype=jnp.float32) * 0.1
    fc1_b = jax.random.normal(k_b1, (Cr,), dtype=jnp.float32) * 0.1
    fc2_w = jax.random.normal(k_w2, (C, Cr, 1, 1), dtype=jnp.float32) * 0.1
    fc2_b = jax.random.normal(k_b2, (C,), dtype=jnp.float32) * 0.1

    out = channel_gate(x, fc1_w, fc1_b, fc2_w, fc2_b, gate_activation="sigmoid")
    out = jax.block_until_ready(out)

    ref = _reference(x, fc1_w, fc1_b, fc2_w, fc2_b, gate_activation="sigmoid")
    assert out.shape == (N, C, H, W), out.shape
    assert jnp.allclose(out, ref, atol=1e-5, rtol=1e-5), (
        float(jnp.max(jnp.abs(out - ref))))

    print("KERNEL_OK")
</pallas_src>

<mosaic_0001>
module attributes {stable_mosaic.version = 11 : i64} {
  func.func @_channel_gate_kernel(%arg0: i32, %arg1: memref<1x64x256xf32, #tpu.memory_space<vmem>>, %arg2: memref<4x64xf32, #tpu.memory_space<vmem>>, %arg3: memref<4x1xf32, #tpu.memory_space<vmem>>, %arg4: memref<64x4xf32, #tpu.memory_space<vmem>>, %arg5: memref<64x1xf32, #tpu.memory_space<vmem>>, %arg6: memref<1x64x256xf32, #tpu.memory_space<vmem>>) attributes {dimension_semantics = [#tpu.dimension_semantics<parallel>], iteration_bounds = array<i64: 2>, scalar_prefetch = 0 : i64, scratch_operands = 0 : i64, tpu.core_type = #tpu.core_type<tc>, window_params = [{transform_indices = @transform_0, window_bounds = array<i64: 1, 64, 256>}, {pipeline_mode = #tpu.pipeline_mode<synchronous>, transform_indices = @transform_1, window_bounds = array<i64: 4, 64>}, {pipeline_mode = #tpu.pipeline_mode<synchronous>, transform_indices = @transform_2, window_bounds = array<i64: 4, 1>}, {pipeline_mode = #tpu.pipeline_mode<synchronous>, transform_indices = @transform_3, window_bounds = array<i64: 64, 4>}, {pipeline_mode = #tpu.pipeline_mode<synchronous>, transform_indices = @transform_4, window_bounds = array<i64: 64, 1>}, {transform_indices = @transform_5, window_bounds = array<i64: 1, 64, 256>}]} {
    %c0 = arith.constant 0 : index
    %c0_0 = arith.constant 0 : index
    %0 = vector.load %arg2[%c0, %c0_0] : memref<4x64xf32, #tpu.memory_space<vmem>>, vector<4x64xf32>
    %c0_1 = arith.constant 0 : index
    %c0_2 = arith.constant 0 : index
    %1 = vector.load %arg3[%c0_1, %c0_2] : memref<4x1xf32, #tpu.memory_space<vmem>>, vector<4x1xf32>
    %c0_3 = arith.constant 0 : index
    %c0_4 = arith.constant 0 : index
    %2 = vector.load %arg4[%c0_3, %c0_4] : memref<64x4xf32, #tpu.memory_space<vmem>>, vector<64x4xf32>
    %c0_5 = arith.constant 0 : index
    %c0_6 = arith.constant 0 : index
    %3 = vector.load %arg5[%c0_5, %c0_6] : memref<64x1xf32, #tpu.memory_space<vmem>>, vector<64x1xf32>
    %c0_7 = arith.constant 0 : index
    %c0_8 = arith.constant 0 : index
    %c0_9 = arith.constant 0 : index
    %4 = vector.load %arg1[%c0_7, %c0_8, %c0_9] : memref<1x64x256xf32, #tpu.memory_space<vmem>>, vector<1x64x256xf32>
    %5 = vector.shape_cast %4 : vector<1x64x256xf32> to vector<64x256xf32>
    %cst = arith.constant dense<0.000000e+00> : vector<64xf32>
    %6 = vector.multi_reduction <add>, %5, %cst [1] : vector<64x256xf32> to vector<64xf32>
    %7 = vector.shape_cast %6 : vector<64xf32> to vector<64x1xf32>
    %cst_10 = arith.constant 3.906250e-03 : f32
    %8 = vector.broadcast %cst_10 : f32 to vector<64x1xf32>
    %9 = arith.mulf %7, %8 : vector<64x1xf32>
    %cst_11 = arith.constant dense<0.000000e+00> : vector<4x1xf32>
    %10 = tpu.matmul %0, %9, %cst_11 {dimension_numbers = #tpu.dot_dimension_numbers<[1], [0], [0], [1], [0, 0, 1, 1], [], []>} : vector<4x64xf32>, vector<64x1xf32>, vector<4x1xf32> -> vector<4x1xf32>
    %11 = arith.addf %10, %1 : vector<4x1xf32>
    %cst_12 = arith.constant 0.000000e+00 : f32
    %12 = vector.broadcast %cst_12 : f32 to vector<4x1xf32>
    %13 = arith.maximumf %11, %12 : vector<4x1xf32>
    %cst_13 = arith.constant dense<0.000000e+00> : vector<64x1xf32>
    %14 = tpu.matmul %2, %13, %cst_13 {dimension_numbers = #tpu.dot_dimension_numbers<[1], [0], [0], [1], [0, 0, 1, 1], [], []>} : vector<64x4xf32>, vector<4x1xf32>, vector<64x1xf32> -> vector<64x1xf32>
    %15 = arith.addf %14, %3 : vector<64x1xf32>
    %cst_14 = arith.constant 0.000000e+00 : f32
    %16 = vector.broadcast %cst_14 : f32 to vector<64x1xf32>
    %17 = arith.subf %16, %15 : vector<64x1xf32>
    %18 = math.exp %17 : vector<64x1xf32>
    %cst_15 = arith.constant 1.000000e+00 : f32
    %19 = vector.broadcast %cst_15 : f32 to vector<64x1xf32>
    %20 = arith.addf %19, %18 : vector<64x1xf32>
    %cst_16 = arith.constant 1.000000e+00 : f32
    %21 = vector.broadcast %cst_16 : f32 to vector<64x1xf32>
    %22 = arith.divf %21, %20 : vector<64x1xf32>
    %23 = vector.broadcast %22 : vector<64x1xf32> to vector<64x256xf32>
    %24 = arith.mulf %5, %23 : vector<64x256xf32>
    %c0_17 = arith.constant 0 : index
    %c0_18 = arith.constant 0 : index
    %c0_19 = arith.constant 0 : index
    %25 = vector.load %arg6[%c0_17, %c0_18, %c0_19] : memref<1x64x256xf32, #tpu.memory_space<vmem>>, vector<1x64x256xf32>
    %26 = vector.shape_cast %25 : vector<1x64x256xf32> to vector<64x256xf32>
    %27 = vector.shape_cast %24 : vector<64x256xf32> to vector<1x64x256xf32>
    tpu.vector_store %arg6[%c0_17, %c0_18, %c0_19], %27 {strides = array<i32>} : memref<1x64x256xf32, #tpu.memory_space<vmem>>, vector<1x64x256xf32>,
    return
  }
  func.func @transform_0(%arg0: i32) -> (i32, i32, i32) {
    %c0_i32 = arith.constant 0 : i32
    %c0_i32_0 = arith.constant 0 : i32
    %c0_i32_1 = arith.constant 0 : i32
    return %arg0, %c0_i32, %c0_i32_0 : i32, i32, i32
  }
  func.func @transform_1(%arg0: i32) -> (i32, i32) {
    %c0_i32 = arith.constant 0 : i32
    %c0_i32_0 = arith.constant 0 : i32
    %c0_i32_1 = arith.constant 0 : i32
    return %c0_i32, %c0_i32_0 : i32, i32
  }
  func.func @transform_2(%arg0: i32) -> (i32, i32) {
    %c0_i32 = arith.constant 0 : i32
    %c0_i32_0 = arith.constant 0 : i32
    %c0_i32_1 = arith.constant 0 : i32
    return %c0_i32, %c0_i32_0 : i32, i32
  }
  func.func @transform_3(%arg0: i32) -> (i32, i32) {
    %c0_i32 = arith.constant 0 : i32
    %c0_i32_0 = arith.constant 0 : i32
    %c0_i32_1 = arith.constant 0 : i32
    return %c0_i32, %c0_i32_0 : i32, i32
  }
  func.func @transform_4(%arg0: i32) -> (i32, i32) {
    %c0_i32 = arith.constant 0 : i32
    %c0_i32_0 = arith.constant 0 : i32
    %c0_i32_1 = arith.constant 0 : i32
    return %c0_i32, %c0_i32_0 : i32, i32
  }
  func.func @transform_5(%arg0: i32) -> (i32, i32, i32) {
    %c0_i32 = arith.constant 0 : i32
    %c0_i32_0 = arith.constant 0 : i32
    %c0_i32_1 = arith.constant 0 : i32
    return %arg0, %c0_i32, %c0_i32_0 : i32, i32, i32
  }
}

</mosaic_0001>

<llo_original>
// kernel: channel_gate.1
$region0: #{channel_gate.1}
  #allocation0 [shape = 'u32[]', space=smem, size = 0x4, offset = 0x4, fixed_abs, tag = 'smem constant byte address 0x4 - core index']
  #allocation1 [shape = 'u32[144,128]{1,0:T(1,128)}', space=vmem, size = 0x12000, scoped, tag = 'internal scratch']
  %s0 = inlined_call_operand.vmem [shape: f32[2,64,256], index: 0, kind: input, shape index: {}]
  %s1 = inlined_call_operand.vmem [shape: f32[4,64], index: 1, kind: input, shape index: {}]
  %s2 = inlined_call_operand.vmem [shape: f32[4,1], index: 2, kind: input, shape index: {}]
  %s3 = inlined_call_operand.vmem [shape: f32[64,4], index: 3, kind: input, shape index: {}]
  %s4 = inlined_call_operand.vmem [shape: f32[64,1], index: 4, kind: input, shape index: {}]
  %s5 = inlined_call_operand.vmem [shape: f32[2,64,256], index: 5, kind: output, shape index: {}]
  %s6 = sld [smem:[#allocation0]]
  $region53: #{channel_gate.1} parent=0
    _
  %s8 = ssub.s32 1, %s6
  %s9 = scalar_select 0, %s8, %s6
  loop: start=0, step=1, limit=4
  $region2: #{channel_gate.1} parent=0 // loop_pre_header
    _
  $region3: #{channel_gate.1} parent=0 // loop_header
    %s11 = sphi 0, %s15
    %p12 = scmp.ge.s32.totalorder %s11, 4
    %s21 = sphi 0, %s23
    %s24 = sphi 0, %s21
    %s25 = sphi 0, %s24
    %s41 = sphi 0, %s25
    %s45 = sphi 0, %s45
    %s47 = sphi 0, %s45
    %s48 = sphi 0, %s47
    %s62 = sphi 0, %s48
    %s66 = sphi 0, %s66
    %s68 = sphi 0, %s66
    %s69 = sphi 0, %s68
    %s83 = sphi 0, %s69
    %s87 = sphi 0, %s87
    %s89 = sphi 0, %s87
    %s90 = sphi 0, %s89
    %s104 = sphi 0, %s90
    %s108 = sphi 0, %s108
    %s110 = sphi 0, %s108
    %s111 = sphi 0, %s110
    %s125 = sphi 0, %s111
    %s131 = sphi 0, %s133
    %s134 = sphi 0, %s131
    %s135 = sphi 0, %s134
    %s151 = sphi 0, %s135
  $region4: #{channel_gate.1} parent=0 // loop_header_branch
    %14 = sbr.rel (%p12) target = $region8
  $region5: #{channel_gate.1} parent=0 // loop_body
    %s16 = ssub.s32 %s11, 1
    %s17 = ssub.s32 %s11, 2
    %s18 = sadd.s32 %s11, 1
    %s19 = ssub.s32 %s11, %s18
    %p20 = scmp.eq.s32.totalorder %s19, 0
    %s22 = sadd.s32 %s21, 1
    %s23 = scalar_select %p20, %s21, %s22
    %p26 = pneg %p20
    %p27 = scmp.eq.s32.totalorder %s11, 1
    %p28 = por %p26, %p27
    %p29 = scmp.ne.s32.totalorder %s21, %s24
    %p30 = scmp.eq.s32.totalorder %s11, 0
    %p31 = por %p29, %p30
    %p32 = scmp.ne.s32.totalorder %s21, %s24
    %p33 = scmp.eq.s32.totalorder %s16, 1
    %p34 = por %p32, %p33
    %p35 = scmp.ne.s32.totalorder %s24, %s25
    %p36 = scmp.eq.s32.totalorder %s16, 0
    %p37 = por %p35, %p36
    %p38 = scmp.ne.s32.totalorder %s24, %s25
    %p39 = scmp.eq.s32.totalorder %s17, 1
    %p40 = por %p38, %p39
    %p42 = scmp.ne.s32.totalorder %s25, %s41
    %p43 = scmp.eq.s32.totalorder %s17, 0
    %p44 = por %p42, %p43
    %s46 = sadd.s32 %s45, 1
    %p49 = scmp.eq.s32.totalorder %s11, 1
    %p50 = scmp.ne.s32.totalorder %s45, %s47
    %p51 = scmp.eq.s32.totalorder %s11, 0
    %p52 = por %p50, %p51
    %p53 = scmp.ne.s32.totalorder %s45, %s47
    %p54 = scmp.eq.s32.totalorder %s16, 1
    %p55 = por %p53, %p54
    %p56 = scmp.ne.s32.totalorder %s47, %s48
    %p57 = scmp.eq.s32.totalorder %s16, 0
    %p58 = por %p56, %p57
    %p59 = scmp.ne.s32.totalorder %s47, %s48
    %p60 = scmp.eq.s32.totalorder %s17, 1
    %p61 = por %p59, %p60
    %p63 = scmp.ne.s32.totalorder %s48, %s62
    %p64 = scmp.eq.s32.totalorder %s17, 0
    %p65 = por %p63, %p64
    %s67 = sadd.s32 %s66, 1
    %p70 = scmp.eq.s32.totalorder %s11, 1
    %p71 = scmp.ne.s32.totalorder %s66, %s68
    %p72 = scmp.eq.s32.totalorder %s11, 0
    %p73 = por %p71, %p72
    %p74 = scmp.ne.s32.totalorder %s66, %s68
    %p75 = scmp.eq.s32.totalorder %s16, 1
    %p76 = por %p74, %p75
    %p77 = scmp.ne.s32.totalorder %s68, %s69
    %p78 = scmp.eq.s32.totalorder %s16, 0
    %p79 = por %p77, %p78
    %p80 = scmp.ne.s32.totalorder %s68, %s69
    %p81 = scmp.eq.s32.totalorder %s17, 1
    %p82 = por %p80, %p81
    %p84 = scmp.ne.s32.totalorder %s69, %s83
    %p85 = scmp.eq.s32.totalorder %s17, 0
    %p86 = por %p84, %p85
    %s88 = sadd.s32 %s87, 1
    %p91 = scmp.eq.s32.totalorder %s11, 1
    %p92 = scmp.ne.s32.totalorder %s87, %s89
    %p93 = scmp.eq.s32.totalorder %s11, 0
    %p94 = por %p92, %p93
    %p95 = scmp.ne.s32.totalorder %s87, %s89
    %p96 = scmp.eq.s32.totalorder %s16, 1
    %p97 = por %p95, %p96
    %p98 = scmp.ne.s32.totalorder %s89, %s90
    %p99 = scmp.eq.s32.totalorder %s16, 0
    %p100 = por %p98, %p99
    %p101 = scmp.ne.s32.totalorder %s89, %s90
    %p102 = scmp.eq.s32.totalorder %s17, 1
    %p103 = por %p101, %p102
    %p105 = scmp.ne.s32.totalorder %s90, %s104
    %p106 = scmp.eq.s32.totalorder %s17, 0
    %p107 = por %p105, %p106
    %s109 = sadd.s32 %s108, 1
    %p112 = scmp.eq.s32.totalorder %s11, 1
    %p113 = scmp.ne.s32.totalorder %s108, %s110
    %p114 = scmp.eq.s32.totalorder %s11, 0
    %p115 = por %p113, %p114
    %p116 = scmp.ne.s32.totalorder %s108, %s110
    %p117 = scmp.eq.s32.totalorder %s16, 1
    %p118 = por %p116, %p117
    %p119 = scmp.ne.s32.totalorder %s110, %s111
    %p120 = scmp.eq.s32.totalorder %s16, 0
    %p121 = por %p119, %p120
    %p122 = scmp.ne.s32.totalorder %s110, %s111
    %p123 = scmp.eq.s32.totalorder %s17, 1
    %p124 = por %p122, %p123
    %p126 = scmp.ne.s32.totalorder %s111, %s125
    %p127 = scmp.eq.s32.totalorder %s17, 0
    %p128 = por %p126, %p127
    %s129 = ssub.s32 %s11, %s18
    %p130 = scmp.eq.s32.totalorder %s129, 0
    %s132 = sadd.s32 %s131, 1
    %s133 = scalar_select %p130, %s131, %s132
    %p136 = pneg %p130
    %p137 = scmp.eq.s32.totalorder %s11, 1
    %p138 = por %p136, %p137
    %p139 = scmp.ne.s32.totalorder %s131, %s134
    %p140 = scmp.eq.s32.totalorder %s11, 0
    %p141 = por %p139, %p140
    %p142 = scmp.ne.s32.totalorder %s131, %s134
    %p143 = scmp.eq.s32.totalorder %s16, 1
    %p144 = por %p142, %p143
    %p145 = scmp.ne.s32.totalorder %s134, %s135
    %p146 = scmp.eq.s32.totalorder %s16, 0
    %p147 = por %p145, %p146
    %p148 = scmp.ne.s32.totalorder %s134, %s135
    %p149 = scmp.eq.s32.totalorder %s17, 1
    %p150 = por %p148, %p149
    %p152 = scmp.ne.s32.totalorder %s135, %s151
    %p153 = scmp.eq.s32.totalorder %s17, 0
    %p154 = por %p152, %p153
    %p155 = scmp.le.s32.totalorder 1, %s11
    %p156 = scmp.lt.s32.totalorder %s11, 3
    %p157 = pnand %p155, %p156
    %p158 = pneg %p157
    // Predicated region
    $region9: #{channel_gate.1} parent=5 // pred_check
      _
    $region10: #{channel_gate.1} parent=5 // pred_check_branch
      %160 = sbr.rel (%p157) target = $region12
    $region11: #{channel_gate.1} parent=5 // pred_region
      %s161 = ssub.s32 %s11, 1
      // Predicated region
      $region13: #{channel_gate.1} parent=11 // pred_check
        %p162 = pneg %p58
      $region14: #{channel_gate.1} parent=11 // pred_check_branch
        %164 = sbr.rel (%p162) target = $region16
      $region15: #{channel_gate.1} parent=11 // pred_region
        _
      $region16: #{channel_gate.1} parent=11 // pred_fallthru
        _
      // Predicated region
      $region17: #{channel_gate.1} parent=11 // pred_check
        %p165 = pneg %p79
      $region18: #{channel_gate.1} parent=11 // pred_check_branch
        %167 = sbr.rel (%p165) target = $region20
      $region19: #{channel_gate.1} parent=11 // pred_region
        _
      $region20: #{channel_gate.1} parent=11 // pred_fallthru
        _
      // Predicated region
      $region21: #{channel_gate.1} parent=11 // pred_check
        %p168 = pneg %p100
      $region22: #{channel_gate.1} parent=11 // pred_check_branch
        %170 = sbr.rel (%p168) target = $region24
      $region23: #{channel_gate.1} parent=11 // pred_region
        _
      $region24: #{channel_gate.1} parent=11 // pred_fallthru
        _
      // Predicated region
      $region25: #{channel_gate.1} parent=11 // pred_check
        %p171 = pneg %p121
      $region26: #{channel_gate.1} parent=11 // pred_check_branch
        %173 = sbr.rel (%p171) target = $region28
      $region27: #{channel_gate.1} parent=11 // pred_region
        _
      $region28: #{channel_gate.1} parent=11 // pred_fallthru
        _
    $region12: #{channel_gate.1} parent=5 // pred_fallthru
      _
    %p174 = scmp.lt.s32.totalorder %s11, 2
    // Predicated region
    $region29: #{channel_gate.1} parent=5 // pred_check
      %p175 = pneg %p174
    $region30: #{channel_gate.1} parent=5 // pred_check_branch
      %177 = sbr.rel (%p175) target = $region32
    $region31: #{channel_gate.1} parent=5 // pred_region
      // Predicated region
      $region33: #{channel_gate.1} parent=31 // pred_check
        %p178 = pneg %p31
      $region34: #{channel_gate.1} parent=31 // pred_check_branch
        %180 = sbr.rel (%p178) target = $region36
      $region35: #{channel_gate.1} parent=31 // pred_region
        %p181 = scmp.lt.s32.totalorder %s11, 1
        %s182 = scalar_select %p181, %s11, 1
        %s183 = smul.addr %s182, 16
        %s184 = smul.addr %s183, 8
        %s185 = scalar_lea.vmem %s0, %s184
      $region36: #{channel_gate.1} parent=31 // pred_fallthru
        _
    $region32: #{channel_gate.1} parent=5 // pred_fallthru
      _
    %p186 = scmp.le.s32.totalorder 1, %s11
    %p187 = scmp.lt.s32.totalorder %s11, 3
    %p188 = pnand %p186, %p187
    %p189 = pneg %p188
    // Predicated region
    $region37: #{channel_gate.1} parent=5 // pred_check
      _
    $region38: #{channel_gate.1} parent=5 // pred_check_branch
      %191 = sbr.rel (%p188) target = $region40
    $region39: #{channel_gate.1} parent=5 // pred_region
      %s192 = ssub.s32 %s11, 1
      %p193 = scmp.lt.s32.totalorder %s16, 1
      %s194 = scalar_select %p193, %s16, 1
      %s195 = smul.addr %s194, 16
      %s196 = smul.addr %s195, 8
      %s197 = scalar_lea.vmem %s0, %s196
      %p198 = pneg %p37
      %p199 = pneg %p34
      %p200 = pneg %p58
      %p201 = pneg %p55
      %p202 = pneg %p79
      %p203 = pneg %p76
      %p204 = pneg %p100
      %p205 = pneg %p97
      %p206 = pneg %p121
      %p207 = pneg %p118
      %p208 = pneg %p147
      %p209 = pneg %p144
      %p210 = scmp.lt.s32.totalorder %s16, 1
      %s211 = scalar_select %p210, %s16, 1
      %s212 = smul.addr %s211, 16
      %s213 = smul.addr %s212, 8
      %s214 = scalar_lea.vmem %s5, %s213
      %p215 = scmp.lt.s32.totalorder %s16, 1
      %s216 = scalar_select %p215, %s16, 1
      %s217 = smul.addr %s216, 16
      %s218 = smul.addr %s217, 8
      %s219 = scalar_lea.vmem %s0, %s218
      %p220 = scmp.lt.s32.totalorder %s16, 1
      %s221 = scalar_select %p220, %s16, 1
      %s222 = smul.addr %s221, 16
      %s223 = smul.addr %s222, 8
      %s224 = scalar_lea.vmem %s5, %s223
      %v225 = vld [vmem:[%s1] sm:$0xf]
      %v226 = vld [vmem:[%s2] sm:$0xf]
      %v227 = vld [vmem:[%s3] sm:$0xff]
      %v228 = vld [vmem:[%s3 + $0x8] sm:$0xff]
      %v229 = vld [vmem:[%s3 + $0x10] sm:$0xff]
      %v230 = vld [vmem:[%s3 + $0x18] sm:$0xff]
      %v231 = vld [vmem:[%s3 + $0x20] sm:$0xff]
      %v232 = vld [vmem:[%s3 + $0x28] sm:$0xff]
      %v233 = vld [vmem:[%s3 + $0x30] sm:$0xff]
      %v234 = vld [vmem:[%s3 + $0x38] sm:$0xff]
      %v235 = vld [vmem:[%s4] sm:$0xff]
      %v236 = vld [vmem:[%s4 + $0x8] sm:$0xff]
      %v237 = vld [vmem:[%s4 + $0x10] sm:$0xff]
      %v238 = vld [vmem:[%s4 + $0x18] sm:$0xff]
      %v239 = vld [vmem:[%s4 + $0x20] sm:$0xff]
      %v240 = vld [vmem:[%s4 + $0x28] sm:$0xff]
      %v241 = vld [vmem:[%s4 + $0x30] sm:$0xff]
      %v242 = vld [vmem:[%s4 + $0x38] sm:$0xff]
      %v243 = vld [vmem:[%s219] sm:$0xff]
      %v244 = vld [vmem:[%s219 + $0x8] sm:$0xff]
      %v245 = vld [vmem:[%s219 + $0x10] sm:$0xff]
      %v246 = vld [vmem:[%s219 + $0x18] sm:$0xff]
      %v247 = vld [vmem:[%s219 + $0x20] sm:$0xff]
      %v248 = vld [vmem:[%s219 + $0x28] sm:$0xff]
      %v249 = vld [vmem:[%s219 + $0x30] sm:$0xff]
      %v250 = vld [vmem:[%s219 + $0x38] sm:$0xff]
      %v251 = vld [vmem:[%s219 + $0x40] sm:$0xff]
      %v252 = vld [vmem:[%s219 + $0x48] sm:$0xff]
      %v253 = vld [vmem:[%s219 + $0x50] sm:$0xff]
      %v254 = vld [vmem:[%s219 + $0x58] sm:$0xff]
      %v255 = vld [vmem:[%s219 + $0x60] sm:$0xff]
      %v256 = vld [vmem:[%s219 + $0x68] sm:$0xff]
      %v257 = vld [vmem:[%s219 + $0x70] sm:$0xff]
      %v258 = vld [vmem:[%s219 + $0x78] sm:$0xff]
      %v259 = vadd.f32 %v243, %v244
      %260 = vadd.xlane.f32.xlu0 %v259
      %v261 = vpop.xlane.xlu0 %260
      %v262 = vadd.f32 %v245, %v246
      %263 = vadd.xlane.f32.xlu0 %v262
      %v264 = vpop.xlane.xlu0 %263
      %v265 = vadd.f32 %v247, %v248
      %266 = vadd.xlane.f32.xlu0 %v265
      %v267 = vpop.xlane.xlu0 %266
      %v268 = vadd.f32 %v249, %v250
      %269 = vadd.xlane.f32.xlu0 %v268
      %v270 = vpop.xlane.xlu0 %269
      %v271 = vadd.f32 %v251, %v252
      %272 = vadd.xlane.f32.xlu0 %v271
      %v273 = vpop.xlane.xlu0 %272
      %v274 = vadd.f32 %v253, %v254
      %275 = vadd.xlane.f32.xlu0 %v274
      %v276 = vpop.xlane.xlu0 %275
      %v277 = vadd.f32 %v255, %v256
      %278 = vadd.xlane.f32.xlu0 %v277
      %v279 = vpop.xlane.xlu0 %278
      %v280 = vadd.f32 %v257, %v258
      %281 = vadd.xlane.f32.xlu0 %v280
      %v282 = vpop.xlane.xlu0 %281
      %v283 = vmul.f32 %v261, 0.00390625
      %v284 = vmul.f32 %v264, 0.00390625
      %v285 = vmul.f32 %v267, 0.00390625
      %v286 = vmul.f32 %v270, 0.00390625
      %v287 = vmul.f32 %v273, 0.00390625
      %v288 = vmul.f32 %v276, 0.00390625
      %v289 = vmul.f32 %v279, 0.00390625
      %v290 = vmul.f32 %v282, 0.00390625
      %vm291 = vcmask 523264
      %v293 = vsel %vm291, %v225, 0
      %295 = vmatprep.subr.mxu0 0.0
      %296 = vmatpush1.msra.mxu0 %v283
      %297 = vmatprep.subr.mxu0 0.0
      %298 = vmatpush1.msra.mxu0 %v284
      %299 = vmatprep.subr.mxu0 0.0
      %300 = vmatpush1.msra.mxu0 %v285
      %301 = vmatprep.subr.mxu0 0.0
      %302 = vmatpush1.msra.mxu0 %v286
      %303 = vmatprep.subr.mxu0 0.0
      %304 = vmatpush1.msra.mxu0 %v287
      %305 = vmatprep.subr.mxu0 0.0
      %306 = vmatpush1.msra.mxu0 %v288
      %307 = vmatprep.subr.mxu0 0.0
      %308 = vmatpush1.msra.mxu0 %v289
      %309 = vmatprep.subr.mxu0 0.0
      %310 = vmatpush1.msra.mxu0 %v290
      %311 = vmatprep.subr.mxu0 0.0
      %312 = vmatpush1.msra.mxu0 0.0
      %313 = vmatprep.subr.mxu0 0.0
      %314 = vmatpush1.msra.mxu0 0.0
      %315 = vmatprep.subr.mxu0 0.0
      %316 = vmatpush1.msra.mxu0 0.0
      %317 = vmatprep.subr.mxu0 0.0
      %318 = vmatpush1.msra.mxu0 0.0
      %319 = vmatprep.subr.mxu0 0.0
      %320 = vmatpush1.msra.mxu0 0.0
      %321 = vmatprep.subr.mxu0 0.0
      %322 = vmatpush1.msra.mxu0 0.0
      %323 = vmatprep.subr.mxu0 0.0
      %324 = vmatpush1.msra.mxu0 0.0
      %325 = vmatprep.subr.mxu0 0.0
      %326 = vmatpush1.msra.mxu0 0.0
      %327 = vmatprep.subr.mxu0 0.0
      %328 = vmatpush1.msra.mxu0 0.0
      %329 = vmatprep.subr.mxu0 0.0
      %330 = vmatpush1.msra.mxu0 0.0
      %331 = vmatprep.subr.mxu0 0.0
      %332 = vmatpush1.msra.mxu0 0.0
      %333 = vmatprep.subr.mxu0 0.0
      %334 = vmatpush1.msra.mxu0 0.0
      %335 = vmatprep.subr.mxu0 0.0
      %336 = vmatpush1.msra.mxu0 0.0
      %337 = vmatprep.subr.mxu0 0.0
      %338 = vmatpush1.msra.mxu0 0.0
      %339 = vmatprep.subr.mxu0 0.0
      %340 = vmatpush1.msra.mxu0 0.0
      %341 = vmatprep.subr.mxu0 0.0
      %342 = vmatpush1.msra.mxu0 0.0
      %343 = vmatprep.subr.mxu0 0.0
      %344 = vmatpush1.msra.mxu0 0.0
      %345 = vmatprep.subr.mxu0 0.0
      %346 = vmatpush1.msra.mxu0 0.0
      %347 = vmatprep.subr.mxu0 0.0
      %348 = vmatpush1.msra.mxu0 0.0
      %349 = vmatprep.subr.mxu0 0.0
      %350 = vmatpush1.msra.mxu0 0.0
      %351 = vmatprep.subr.mxu0 0.0
      %352 = vmatpush1.msra.mxu0 0.0
      %353 = vmatprep.subr.mxu0 0.0
      %354 = vmatpush1.msra.mxu0 0.0
      %355 = vmatprep.subr.mxu0 0.0
      %356 = vmatpush1.msra.mxu0 0.0
      %357 = vmatprep.subr.mxu0 0.0
      %358 = vmatpush1.msra.mxu0 0.0
      %359 = vmatprep.mubr.f32.mxu0 0.0
      %360 = vmatmul.mubr.f32.gmra.mrb[0].mxu0 %v293
      %v361 = vpop.f32.mrb[0].mxu0
      %v362 = vadd.f32 %v226, %v361
      %v363 = vpop.f32.mrb[0].mxu0
      %364 = vdwg.mxu0
      %v365 = vmax.f32 %v362, 0.0
      %vm366 = vcmask 31744
      %v368 = vsel %vm366, %v227, 0
      %v371 = vsel %vm366, %v228, 0
      %v374 = vsel %vm366, %v229, 0
      %v377 = vsel %vm366, %v230, 0
      %v380 = vsel %vm366, %v231, 0
      %v383 = vsel %vm366, %v232, 0
      %v386 = vsel %vm366, %v233, 0
      %v389 = vsel %vm366, %v234, 0
      %vm391 = vcmask 1043456
      %v393 = vsel %vm391, %v365, 0
      %395 = vmatprep.subr.mxu0 0.0
      %396 = vmatpush1.msra.mxu0 %v393
      %397 = vmatprep.subr.mxu0 0.0
      %398 = vmatpush1.msra.mxu0 0.0
      %399 = vmatprep.subr.mxu0 0.0
      %400 = vmatpush1.msra.mxu0 0.0
      %401 = vmatprep.subr.mxu0 0.0
      %402 = vmatpush1.msra.mxu0 0.0
      %403 = vmatprep.subr.mxu0 0.0
      %404 = vmatpush1.msra.mxu0 0.0
      %405 = vmatprep.subr.mxu0 0.0
      %406 = vmatpush1.msra.mxu0 0.0
      %407 = vmatprep.subr.mxu0 0.0
      %408 = vmatpush1.msra.mxu0 0.0
      %409 = vmatprep.subr.mxu0 0.0
      %410 = vmatpush1.msra.mxu0 0.0
      %411 = vmatprep.subr.mxu0 0.0
      %412 = vmatpush1.msra.mxu0 0.0
      %413 = vmatprep.subr.mxu0 0.0
      %414 = vmatpush1.msra.mxu0 0.0
      %415 = vmatprep.subr.mxu0 0.0
      %416 = vmatpush1.msra.mxu0 0.0
      %417 = vmatprep.subr.mxu0 0.0
      %418 = vmatpush1.msra.mxu0 0.0
      %419 = vmatprep.subr.mxu0 0.0
      %420 = vmatpush1.msra.mxu0 0.0
      %421 = vmatprep.subr.mxu0 0.0
      %422 = vmatpush1.msra.mxu0 0.0
      %423 = vmatprep.subr.mxu0 0.0
      %424 = vmatpush1.msra.mxu0 0.0
      %425 = vmatprep.subr.mxu0 0.0
      %426 = vmatpush1.msra.mxu0 0.0
      %427 = vmatprep.subr.mxu0 0.0
      %428 = vmatpush1.msra.mxu0 0.0
      %429 = vmatprep.subr.mxu0 0.0
      %430 = vmatpush1.msra.mxu0 0.0
      %431 = vmatprep.subr.mxu0 0.0
      %432 = vmatpush1.msra.mxu0 0.0
      %433 = vmatprep.subr.mxu0 0.0
      %434 = vmatpush1.msra.mxu0 0.0
      %435 = vmatprep.subr.mxu0 0.0
      %436 = vmatpush1.msra.mxu0 0.0
      %437 = vmatprep.subr.mxu0 0.0
      %438 = vmatpush1.msra.mxu0 0.0
      %439 = vmatprep.subr.mxu0 0.0
      %440 = vmatpush1.msra.mxu0 0.0
      %441 = vmatprep.subr.mxu0 0.0
      %442 = vmatpush1.msra.mxu0 0.0
      %443 = vmatprep.subr.mxu0 0.0
      %444 = vmatpush1.msra.mxu0 0.0
      %445 = vmatprep.subr.mxu0 0.0
      %446 = vmatpush1.msra.mxu0 0.0
      %447 = vmatprep.subr.mxu0 0.0
      %448 = vmatpush1.msra.mxu0 0.0
      %449 = vmatprep.subr.mxu0 0.0
      %450 = vmatpush1.msra.mxu0 0.0
      %451 = vmatprep.subr.mxu0 0.0
      %452 = vmatpush1.msra.mxu0 0.0
      %453 = vmatprep.subr.mxu0 0.0
      %454 = vmatpush1.msra.mxu0 0.0
      %455 = vmatprep.subr.mxu0 0.0
      %456 = vmatpush1.msra.mxu0 0.0
      %457 = vmatprep.subr.mxu0 0.0
      %458 = vmatpush1.msra.mxu0 0.0
      %459 = vmatprep.mubr.f32.mxu0 0.0
      %460 = vmatmul.mubr.f32.gmra.mrb[0].mxu0 %v368
      %v461 = vpop.f32.mrb[0].mxu0
      %v462 = vadd.f32 %v235, %v461
      %v463 = vpop.f32.mrb[0].mxu0
      %464 = vmatprep.mubr.f32.mxu0 0.0
      %465 = vmatmul.mubr.f32.gmra.mrb[0].mxu0 %v371
      %v466 = vpop.f32.mrb[0].mxu0
      %v467 = vadd.f32 %v236, %v466
      %v468 = vpop.f32.mrb[0].mxu0
      %469 = vmatprep.mubr.f32.mxu0 0.0
      %470 = vmatmul.mubr.f32.gmra.mrb[0].mxu0 %v374
      %v471 = vpop.f32.mrb[0].mxu0
      %v472 = vadd.f32 %v237, %v471
      %v473 = vpop.f32.mrb[0].mxu0
      %474 = vmatprep.mubr.f32.mxu0 0.0
      %475 = vmatmul.mubr.f32.gmra.mrb[0].mxu0 %v377
      %v476 = vpop.f32.mrb[0].mxu0
      %v477 = vadd.f32 %v238, %v476
      %v478 = vpop.f32.mrb[0].mxu0
      %479 = vmatprep.mubr.f32.mxu0 0.0
      %480 = vmatmul.mubr.f32.gmra.mrb[0].mxu0 %v380
      %v481 = vpop.f32.mrb[0].mxu0
      %v482 = vadd.f32 %v239, %v481
      %v483 = vpop.f32.mrb[0].mxu0
      %484 = vmatprep.mubr.f32.mxu0 0.0
      %485 = vmatmul.mubr.f32.gmra.mrb[0].mxu0 %v383
      %v486 = vpop.f32.mrb[0].mxu0
      %v487 = vadd.f32 %v240, %v486
      %v488 = vpop.f32.mrb[0].mxu0
      %489 = vmatprep.mubr.f32.mxu0 0.0
      %490 = vmatmul.mubr.f32.gmra.mrb[0].mxu0 %v386
      %v491 = vpop.f32.mrb[0].mxu0
      %v492 = vadd.f32 %v241, %v491
      %v493 = vpop.f32.mrb[0].mxu0
      %494 = vmatprep.mubr.f32.mxu0 0.0
      %495 = vmatmul.mubr.f32.gmra.mrb[0].mxu0 %v389
      %v496 = vpop.f32.mrb[0].mxu0
      %v497 = vadd.f32 %v242, %v496
      %v498 = vpop.f32.mrb[0].mxu0
      %499 = vdwg.mxu0
      %v500 = vsub.f32 0.0, %v462
      %v501 = vsub.f32 0.0, %v467
      %v502 = vsub.f32 0.0, %v472
      %v503 = vsub.f32 0.0, %v477
      %v504 = vsub.f32 0.0, %v482
      %v505 = vsub.f32 0.0, %v487
      %v506 = vsub.f32 0.0, %v492
      %v507 = vsub.f32 0.0, %v497
      %v508 = vmul.f32 %v500, 1.442695
      %v509 = vpow.pop %v508
      %v510 = vmul.f32 %v501, 1.442695
      %v511 = vpow.pop %v510
      %v512 = vmul.f32 %v502, 1.442695
      %v513 = vpow.pop %v512
      %v514 = vmul.f32 %v503, 1.442695
      %v515 = vpow.pop %v514
      %v516 = vmul.f32 %v504, 1.442695
      %v517 = vpow.pop %v516
      %v518 = vmul.f32 %v505, 1.442695
      %v519 = vpow.pop %v518
      %v520 = vmul.f32 %v506, 1.442695
      %v521 = vpow.pop %v520
      %v522 = vmul.f32 %v507, 1.442695
      %v523 = vpow.pop %v522
      %v524 = vadd.f32 %v509, 1.0
      %v525 = vadd.f32 %v511, 1.0
      %v526 = vadd.f32 %v513, 1.0
      %v527 = vadd.f32 %v515, 1.0
      %v528 = vadd.f32 %v517, 1.0
      %v529 = vadd.f32 %v519, 1.0
      %v530 = vadd.f32 %v521, 1.0
      %v531 = vadd.f32 %v523, 1.0
      %v532 = vrcp.pop %v524
      %v533 = vmul.f32 1.0, %v532
      %v534 = vrcp.pop %v525
      %v535 = vmul.f32 1.0, %v534
      %v536 = vrcp.pop %v526
      %v537 = vmul.f32 1.0, %v536
      %v538 = vrcp.pop %v527
      %v539 = vmul.f32 1.0, %v538
      %v540 = vrcp.pop %v528
      %v541 = vmul.f32 1.0, %v540
      %v542 = vrcp.pop %v529
      %v543 = vmul.f32 1.0, %v542
      %v544 = vrcp.pop %v530
      %v545 = vmul.f32 1.0, %v544
      %v546 = vrcp.pop %v531
      %v547 = vmul.f32 1.0, %v546
      %549 = vset.pattern.permute.xlu0 0
      %550 = vperm.xlu0 %549, %v533
      %v551 = vpop.permute.xlu0 %550
      %554 = vset.pattern.permute.xlu0 0
      %555 = vperm.xlu0 %554, %v535
      %v556 = vpop.permute.xlu0 %555
      %559 = vset.pattern.permute.xlu0 0
      %560 = vperm.xlu0 %559, %v537
      %v561 = vpop.permute.xlu0 %560
      %564 = vset.pattern.permute.xlu0 0
      %565 = vperm.xlu0 %564, %v539
      %v566 = vpop.permute.xlu0 %565
      %569 = vset.pattern.permute.xlu0 0
      %570 = vperm.xlu0 %569, %v541
      %v571 = vpop.permute.xlu0 %570
      %574 = vset.pattern.permute.xlu0 0
      %575 = vperm.xlu0 %574, %v543
      %v576 = vpop.permute.xlu0 %575
      %579 = vset.pattern.permute.xlu0 0
      %580 = vperm.xlu0 %579, %v545
      %v581 = vpop.permute.xlu0 %580
      %584 = vset.pattern.permute.xlu0 0
      %585 = vperm.xlu0 %584, %v547
      %v586 = vpop.permute.xlu0 %585
      %v588 = vmul.f32 %v243, %v551
      %v589 = vmul.f32 %v244, %v551
      %v590 = vmul.f32 %v245, %v556
      %v591 = vmul.f32 %v246, %v556
      %v592 = vmul.f32 %v247, %v561
      %v593 = vmul.f32 %v248, %v561
      %v594 = vmul.f32 %v249, %v566
      %v595 = vmul.f32 %v250, %v566
      %v596 = vmul.f32 %v251, %v571
      %v597 = vmul.f32 %v252, %v571
      %v598 = vmul.f32 %v253, %v576
      %v599 = vmul.f32 %v254, %v576
      %v600 = vmul.f32 %v255, %v581
      %v601 = vmul.f32 %v256, %v581
      %v602 = vmul.f32 %v257, %v586
      %v603 = vmul.f32 %v258, %v586
      %604 = vst [vmem:[%s224] sm:$0xff] %v588
      %605 = vst [vmem:[%s224 + $0x8] sm:$0xff] %v589
      %606 = vst [vmem:[%s224 + $0x10] sm:$0xff] %v590
      %607 = vst [vmem:[%s224 + $0x18] sm:$0xff] %v591
      %608 = vst [vmem:[%s224 + $0x20] sm:$0xff] %v592
      %609 = vst [vmem:[%s224 + $0x28] sm:$0xff] %v593
      %610 = vst [vmem:[%s224 + $0x30] sm:$0xff] %v594
      %611 = vst [vmem:[%s224 + $0x38] sm:$0xff] %v595
      %612 = vst [vmem:[%s224 + $0x40] sm:$0xff] %v596
      %613 = vst [vmem:[%s224 + $0x48] sm:$0xff] %v597
      %614 = vst [vmem:[%s224 + $0x50] sm:$0xff] %v598
      %615 = vst [vmem:[%s224 + $0x58] sm:$0xff] %v599
      %616 = vst [vmem:[%s224 + $0x60] sm:$0xff] %v600
      %617 = vst [vmem:[%s224 + $0x68] sm:$0xff] %v601
      %618 = vst [vmem:[%s224 + $0x70] sm:$0xff] %v602
      %619 = vst [vmem:[%s224 + $0x78] sm:$0xff] %v603
      %p620 = scmp.lt.s32.totalorder %s16, 1
      %s621 = scalar_select %p620, %s16, 1
      %s622 = smul.addr %s621, 16
      %s623 = smul.addr %s622, 8
      %s624 = scalar_lea.vmem %s5, %s623
      // Predicated region
      $region41: #{channel_gate.1} parent=39 // pred_check
        %p625 = pneg %p144
      $region42: #{channel_gate.1} parent=39 // pred_check_branch
        %627 = sbr.rel (%p625) target = $region44
      $region43: #{channel_gate.1} parent=39 // pred_region
        _
      $region44: #{channel_gate.1} parent=39 // pred_fallthru
        _
    $region40: #{channel_gate.1} parent=5 // pred_fallthru
      _
    %p628 = scmp.le.s32.totalorder 2, %s11
    // Predicated region
    $region45: #{channel_gate.1} parent=5 // pred_check
      %p629 = pneg %p628
    $region46: #{channel_gate.1} parent=5 // pred_check_branch
      %631 = sbr.rel (%p629) target = $region48
    $region47: #{channel_gate.1} parent=5 // pred_region
      %s632 = ssub.s32 %s11, 2
      // Predicated region
      $region49: #{channel_gate.1} parent=47 // pred_check
        %p633 = pneg %p150
      $region50: #{channel_gate.1} parent=47 // pred_check_branch
        %635 = sbr.rel (%p633) target = $region52
      $region51: #{channel_gate.1} parent=47 // pred_region
        %p636 = scmp.lt.s32.totalorder %s17, 1
        %s637 = scalar_select %p636, %s17, 1
        %s638 = smul.addr %s637, 16
        %s639 = smul.addr %s638, 8
        %s640 = scalar_lea.vmem %s5, %s639
      $region52: #{channel_gate.1} parent=47 // pred_fallthru
        _
    $region48: #{channel_gate.1} parent=5 // pred_fallthru
      _
  $region6: #{channel_gate.1} parent=0 // loop_footer
    %s15 = sadd.s32 1, %s11
  $region7: #{channel_gate.1} parent=0 // loop_footer_branch
    %10 = sbr.rel target = $region3
  $region8: #{channel_gate.1} parent=0 // loop_exit
    _

</llo_original>
